<compile_context>
chip_gen: v5e
topology: v5e:2x2
jax: 0.10.0
libtpu: 0.0.40
codegen_flags: <defaults>
</compile_context>

<pallas_src>
import jax
import jax.numpy as jnp
from jax.experimental import pallas as pl
from jax.experimental.pallas import tpu as pltpu


def _round_up(x, m):
    return (x + m - 1) // m * m


def _pad2d(a, rows, cols):
    a = a.astype(jnp.float32)
    return jnp.zeros((rows, cols), jnp.float32).at[:a.shape[0], :a.shape[1]].set(a)


def ffnn_kernel(ids_ref, table_ref, vw_ref, vb_ref, v2w_ref, v2b_ref,
                ww_ref, wb_ref, out_ref):
    ids = ids_ref[...]                                   # [TB, S] int32 token ids
    tb, seq = ids.shape
    vocab_p = table_ref.shape[0]

    # counts[b, v] = #{s : ids[b, s] == v}; accumulated one sequence position
    # at a time so only one [TB, vocab_p] accumulator is ever live
    # (no [TB, S, vocab] 3-D one-hot, no cross-sublane reduce).
    iota_v = jax.lax.broadcasted_iota(jnp.int32, (tb, vocab_p), 1)
    counts = jnp.zeros((tb, vocab_p), jnp.float32)
    for s in range(seq):                                 # seq is small & static
        counts = counts + (ids[:, s:s + 1] == iota_v).astype(jnp.float32)

    # sum_s emb[ids[b, s]] as one MXU matmul (K = vocab_p is 128-aligned).
    summed = jnp.dot(counts, table_ref[...],
                     preferred_element_type=jnp.float32)              # [TB, D_p]

    # The 1/S mean factor is pre-folded into vw, so this equals mean @ V + b.
    h1 = jnp.maximum(
        jnp.dot(summed, vw_ref[...], preferred_element_type=jnp.float32)
        + vb_ref[...], 0.0)                                           # ReLU(V(mean))
    h2 = jnp.maximum(
        jnp.dot(h1, v2w_ref[...], preferred_element_type=jnp.float32)
        + v2b_ref[...], 0.0)                                          # ReLU(V2(.))
    out_ref[...] = (
        jnp.dot(h2, ww_ref[...], preferred_element_type=jnp.float32) + wb_ref[...])


def ffnn_forward(x_ids, emb_table, vw, vb, v2w, v2b, ww, wb, *, tb_max=512):
    """x_ids: [B, S] int32 token ids. Linear weights are [in, out] (transposed vs PyTorch)."""
    B, S = x_ids.shape
    vocab, D = emb_table.shape
    hid = vw.shape[1]
    out = ww.shape[1]
    f32 = jnp.float32

    # 128-align every contraction / lane dimension (zero padding is a no-op).
    vocab_p = _round_up(vocab, 128)
    D_p = _round_up(D, 128)
    hid_p = _round_up(hid, 128)
    out_p = _round_up(out, 128)

    table_p = _pad2d(emb_table, vocab_p, D_p)
    vw_p = _pad2d(vw / S, D_p, hid_p)        # fold the mean's 1/S into V
    vb_p = _pad2d(vb, 1, hid_p)
    v2w_p = _pad2d(v2w, hid_p, hid_p)
    v2b_p = _pad2d(v2b, 1, hid_p)
    ww_p = _pad2d(ww, hid_p, out_p)
    wb_p = _pad2d(wb, 1, out_p)

    # Batch tiling: ~half the batch per step (>=2 grid steps for medium B so
    # v7x megacore sharding has work), multiple of 8 sublanes, capped at tb_max.
    TB = min(tb_max, max(8, _round_up(pl.cdiv(B, 2), 8)))
    B_pad = _round_up(B, TB)
    ids = x_ids.astype(jnp.int32)
    if B_pad != B:
        ids = jnp.pad(ids, ((0, B_pad - B), (0, 0)))

    const2 = lambda i: (0, 0)
    y_pad = pl.pallas_call(
        ffnn_kernel,
        out_shape=jax.ShapeDtypeStruct((B_pad, out_p), f32),
        grid=(B_pad // TB,),
        in_specs=[
            pl.BlockSpec((TB, S), lambda i: (i, 0)),        # token ids (tiled on batch)
            pl.BlockSpec((vocab_p, D_p), const2),           # embedding table (VMEM-resident)
            pl.BlockSpec((D_p, hid_p), const2),             # V  weight (1/S folded in)
            pl.BlockSpec((1, hid_p), const2),               # V  bias
            pl.BlockSpec((hid_p, hid_p), const2),           # V2 weight
            pl.BlockSpec((1, hid_p), const2),               # V2 bias
            pl.BlockSpec((hid_p, out_p), const2),           # W  weight (lane-padded)
            pl.BlockSpec((1, out_p), const2),               # W  bias   (lane-padded)
        ],
        out_specs=pl.BlockSpec((TB, out_p), lambda i: (i, 0)),
        compiler_params=pltpu.CompilerParams(
            dimension_semantics=("parallel",),              # v7x: shard batch over 2 TCs
            vmem_limit_bytes=32 * 1024 * 1024,
        ),
    )(ids, table_p, vw_p, vb_p, v2w_p, v2b_p, ww_p, wb_p)

    return y_pad[:B, :out]


def xavier_uniform(key, fan_in, fan_out):
    limit = jnp.sqrt(6.0 / (fan_in + fan_out))
    # stored as [in, out] (transpose of PyTorch's [out, in])
    return jax.random.uniform(key, (fan_in, fan_out), jnp.float32, -limit, limit)


if __name__ == "__main__":
    # Small shapes consistent with the module: inp = embedding dim.
    vocab, inp, hid, out = 50, 32, 32, 4
    B, S = 8, 8

    key = jax.random.PRNGKey(0)
    k_emb, k_v, k_v2, k_w, k_vb, k_v2b, k_wb, k_x = jax.random.split(key, 8)

    emb_table = jax.random.normal(k_emb, (vocab, inp), jnp.float32)

    # Deterministic init (xavier_uniform for V and W like __init__).
    V_w  = xavier_uniform(k_v, inp, hid)
    V_b  = jax.random.uniform(k_vb, (1, hid), jnp.float32, -0.1, 0.1)
    V2_w = jax.random.uniform(k_v2, (hid, hid), jnp.float32, -0.1, 0.1)
    V2_b = jax.random.uniform(k_v2b, (1, hid), jnp.float32, -0.1, 0.1)
    W_w  = xavier_uniform(k_w, hid, out)
    W_b  = jax.random.uniform(k_wb, (1, out), jnp.float32, -0.1, 0.1)

    x_ids = jax.random.randint(k_x, (B, S), 0, vocab, dtype=jnp.int32)

    y = ffnn_forward(x_ids, emb_table, V_w, V_b, V2_w, V2_b, W_w, W_b)
    jax.block_until_ready(y)

    # Pure-JAX reference check (gather -> mean -> V -> ReLU -> V2 -> ReLU -> W).
    emb = jnp.take(emb_table, x_ids, axis=0)
    mean = jnp.mean(emb, axis=1)
    ref = jnp.maximum(mean @ V_w + V_b, 0.0)
    ref = jnp.maximum(ref @ V2_w + V2_b, 0.0)
    ref = ref @ W_w + W_b
    assert y.shape == ref.shape
    assert jnp.allclose(y, ref, atol=1e-4, rtol=1e-4), "mismatch vs reference"

    print("KERNEL_OK")
</pallas_src>

<mosaic_0001>
module attributes {stable_mosaic.version = 11 : i64} {
  func.func @ffnn_kernel(%arg0: i32, %arg1: memref<8x8xi32, #tpu.memory_space<vmem>>, %arg2: memref<128x128xf32, #tpu.memory_space<vmem>>, %arg3: memref<128x128xf32, #tpu.memory_space<vmem>>, %arg4: memref<1x128xf32, #tpu.memory_space<vmem>>, %arg5: memref<128x128xf32, #tpu.memory_space<vmem>>, %arg6: memref<1x128xf32, #tpu.memory_space<vmem>>, %arg7: memref<128x128xf32, #tpu.memory_space<vmem>>, %arg8: memref<1x128xf32, #tpu.memory_space<vmem>>, %arg9: memref<8x128xf32, #tpu.memory_space<vmem>>) attributes {dimension_semantics = [#tpu.dimension_semantics<parallel>], iteration_bounds = array<i64: 1>, scalar_prefetch = 0 : i64, scratch_operands = 0 : i64, tpu.core_type = #tpu.core_type<tc>, window_params = [{transform_indices = @transform_0, window_bounds = array<i64: 8, 8>}, {pipeline_mode = #tpu.pipeline_mode<synchronous>, transform_indices = @transform_1, window_bounds = array<i64: 128, 128>}, {pipeline_mode = #tpu.pipeline_mode<synchronous>, transform_indices = @transform_2, window_bounds = array<i64: 128, 128>}, {pipeline_mode = #tpu.pipeline_mode<synchronous>, transform_indices = @transform_3, window_bounds = array<i64: 1, 128>}, {pipeline_mode = #tpu.pipeline_mode<synchronous>, transform_indices = @transform_4, window_bounds = array<i64: 128, 128>}, {pipeline_mode = #tpu.pipeline_mode<synchronous>, transform_indices = @transform_5, window_bounds = array<i64: 1, 128>}, {pipeline_mode = #tpu.pipeline_mode<synchronous>, transform_indices = @transform_6, window_bounds = array<i64: 128, 128>}, {pipeline_mode = #tpu.pipeline_mode<synchronous>, transform_indices = @transform_7, window_bounds = array<i64: 1, 128>}, {transform_indices = @transform_8, window_bounds = array<i64: 8, 128>}]} {
    %c0 = arith.constant 0 : index
    %c0_0 = arith.constant 0 : index
    %0 = vector.load %arg1[%c0, %c0_0] : memref<8x8xi32, #tpu.memory_space<vmem>>, vector<8x8xi32>
    %1 = tpu.iota {dimensions = array<i32: 1>} : vector<8x128xi32>
    %cst = arith.constant 0.000000e+00 : f32
    %2 = vector.broadcast %cst : f32 to vector<8x128xf32>
    %3 = vector.extract_strided_slice %0 {offsets = [0, 0], sizes = [8, 1], strides = [1, 1]} : vector<8x8xi32> to vector<8x1xi32>
    %4 = vector.broadcast %3 : vector<8x1xi32> to vector<8x128xi32>
    %5 = arith.cmpi eq, %4, %1 : vector<8x128xi32>
    %6 = arith.extui %5 : vector<8x128xi1> to vector<8x128xi32>
    %7 = arith.sitofp %6 : vector<8x128xi32> to vector<8x128xf32>
    %8 = arith.addf %2, %7 : vector<8x128xf32>
    %9 = vector.extract_strided_slice %0 {offsets = [0, 1], sizes = [8, 1], strides = [1, 1]} : vector<8x8xi32> to vector<8x1xi32>
    %10 = vector.broadcast %9 : vector<8x1xi32> to vector<8x128xi32>
    %11 = arith.cmpi eq, %10, %1 : vector<8x128xi32>
    %12 = arith.extui %11 : vector<8x128xi1> to vector<8x128xi32>
    %13 = arith.sitofp %12 : vector<8x128xi32> to vector<8x128xf32>
    %14 = arith.addf %8, %13 : vector<8x128xf32>
    %15 = vector.extract_strided_slice %0 {offsets = [0, 2], sizes = [8, 1], strides = [1, 1]} : vector<8x8xi32> to vector<8x1xi32>
    %16 = vector.broadcast %15 : vector<8x1xi32> to vector<8x128xi32>
    %17 = arith.cmpi eq, %16, %1 : vector<8x128xi32>
    %18 = arith.extui %17 : vector<8x128xi1> to vector<8x128xi32>
    %19 = arith.sitofp %18 : vector<8x128xi32> to vector<8x128xf32>
    %20 = arith.addf %14, %19 : vector<8x128xf32>
    %21 = vector.extract_strided_slice %0 {offsets = [0, 3], sizes = [8, 1], strides = [1, 1]} : vector<8x8xi32> to vector<8x1xi32>
    %22 = vector.broadcast %21 : vector<8x1xi32> to vector<8x128xi32>
    %23 = arith.cmpi eq, %22, %1 : vector<8x128xi32>
    %24 = arith.extui %23 : vector<8x128xi1> to vector<8x128xi32>
    %25 = arith.sitofp %24 : vector<8x128xi32> to vector<8x128xf32>
    %26 = arith.addf %20, %25 : vector<8x128xf32>
    %27 = vector.extract_strided_slice %0 {offsets = [0, 4], sizes = [8, 1], strides = [1, 1]} : vector<8x8xi32> to vector<8x1xi32>
    %28 = vector.broadcast %27 : vector<8x1xi32> to vector<8x128xi32>
    %29 = arith.cmpi eq, %28, %1 : vector<8x128xi32>
    %30 = arith.extui %29 : vector<8x128xi1> to vector<8x128xi32>
    %31 = arith.sitofp %30 : vector<8x128xi32> to vector<8x128xf32>
    %32 = arith.addf %26, %31 : vector<8x128xf32>
    %33 = vector.extract_strided_slice %0 {offsets = [0, 5], sizes = [8, 1], strides = [1, 1]} : vector<8x8xi32> to vector<8x1xi32>
    %34 = vector.broadcast %33 : vector<8x1xi32> to vector<8x128xi32>
    %35 = arith.cmpi eq, %34, %1 : vector<8x128xi32>
    %36 = arith.extui %35 : vector<8x128xi1> to vector<8x128xi32>
    %37 = arith.sitofp %36 : vector<8x128xi32> to vector<8x128xf32>
    %38 = arith.addf %32, %37 : vector<8x128xf32>
    %39 = vector.extract_strided_slice %0 {offsets = [0, 6], sizes = [8, 1], strides = [1, 1]} : vector<8x8xi32> to vector<8x1xi32>
    %40 = vector.broadcast %39 : vector<8x1xi32> to vector<8x128xi32>
    %41 = arith.cmpi eq, %40, %1 : vector<8x128xi32>
    %42 = arith.extui %41 : vector<8x128xi1> to vector<8x128xi32>
    %43 = arith.sitofp %42 : vector<8x128xi32> to vector<8x128xf32>
    %44 = arith.addf %38, %43 : vector<8x128xf32>
    %45 = vector.extract_strided_slice %0 {offsets = [0, 7], sizes = [8, 1], strides = [1, 1]} : vector<8x8xi32> to vector<8x1xi32>
    %46 = vector.broadcast %45 : vector<8x1xi32> to vector<8x128xi32>
    %47 = arith.cmpi eq, %46, %1 : vector<8x128xi32>
    %48 = arith.extui %47 : vector<8x128xi1> to vector<8x128xi32>
    %49 = arith.sitofp %48 : vector<8x128xi32> to vector<8x128xf32>
    %50 = arith.addf %44, %49 : vector<8x128xf32>
    %c0_1 = arith.constant 0 : index
    %c0_2 = arith.constant 0 : index
    %51 = vector.load %arg2[%c0_1, %c0_2] : memref<128x128xf32, #tpu.memory_space<vmem>>, vector<128x128xf32>
    %cst_3 = arith.constant dense<0.000000e+00> : vector<8x128xf32>
    %52 = tpu.matmul %50, %51, %cst_3 {dimension_numbers = #tpu.dot_dimension_numbers<[1], [0], [0], [1], [0, 0, 1, 1], [], []>} : vector<8x128xf32>, vector<128x128xf32>, vector<8x128xf32> -> vector<8x128xf32>
    %c0_4 = arith.constant 0 : index
    %c0_5 = arith.constant 0 : index
    %53 = vector.load %arg3[%c0_4, %c0_5] : memref<128x128xf32, #tpu.memory_space<vmem>>, vector<128x128xf32>
    %cst_6 = arith.constant dense<0.000000e+00> : vector<8x128xf32>
    %54 = tpu.matmul %52, %53, %cst_6 {dimension_numbers = #tpu.dot_dimension_numbers<[1], [0], [0], [1], [0, 0, 1, 1], [], []>} : vector<8x128xf32>, vector<128x128xf32>, vector<8x128xf32> -> vector<8x128xf32>
    %c0_7 = arith.constant 0 : index
    %c0_8 = arith.constant 0 : index
    %55 = vector.load %arg4[%c0_7, %c0_8] : memref<1x128xf32, #tpu.memory_space<vmem>>, vector<1x128xf32>
    %56 = vector.broadcast %55 : vector<1x128xf32> to vector<8x128xf32>
    %57 = arith.addf %54, %56 : vector<8x128xf32>
    %cst_9 = arith.constant 0.000000e+00 : f32
    %58 = vector.broadcast %cst_9 : f32 to vector<8x128xf32>
    %59 = arith.maximumf %57, %58 : vector<8x128xf32>
    %c0_10 = arith.constant 0 : index
    %c0_11 = arith.constant 0 : index
    %60 = vector.load %arg5[%c0_10, %c0_11] : memref<128x128xf32, #tpu.memory_space<vmem>>, vector<128x128xf32>
    %cst_12 = arith.constant dense<0.000000e+00> : vector<8x128xf32>
    %61 = tpu.matmul %59, %60, %cst_12 {dimension_numbers = #tpu.dot_dimension_numbers<[1], [0], [0], [1], [0, 0, 1, 1], [], []>} : vector<8x128xf32>, vector<128x128xf32>, vector<8x128xf32> -> vector<8x128xf32>
    %c0_13 = arith.constant 0 : index
    %c0_14 = arith.constant 0 : index
    %62 = vector.load %arg6[%c0_13, %c0_14] : memref<1x128xf32, #tpu.memory_space<vmem>>, vector<1x128xf32>
    %63 = vector.broadcast %62 : vector<1x128xf32> to vector<8x128xf32>
    %64 = arith.addf %61, %63 : vector<8x128xf32>
    %cst_15 = arith.constant 0.000000e+00 : f32
    %65 = vector.broadcast %cst_15 : f32 to vector<8x128xf32>
    %66 = arith.maximumf %64, %65 : vector<8x128xf32>
    %c0_16 = arith.constant 0 : index
    %c0_17 = arith.constant 0 : index
    %67 = vector.load %arg7[%c0_16, %c0_17] : memref<128x128xf32, #tpu.memory_space<vmem>>, vector<128x128xf32>
    %cst_18 = arith.constant dense<0.000000e+00> : vector<8x128xf32>
    %68 = tpu.matmul %66, %67, %cst_18 {dimension_numbers = #tpu.dot_dimension_numbers<[1], [0], [0], [1], [0, 0, 1, 1], [], []>} : vector<8x128xf32>, vector<128x128xf32>, vector<8x128xf32> -> vector<8x128xf32>
    %c0_19 = arith.constant 0 : index
    %c0_20 = arith.constant 0 : index
    %69 = vector.load %arg8[%c0_19, %c0_20] : memref<1x128xf32, #tpu.memory_space<vmem>>, vector<1x128xf32>
    %70 = vector.broadcast %69 : vector<1x128xf32> to vector<8x128xf32>
    %71 = arith.addf %68, %70 : vector<8x128xf32>
    %c0_21 = arith.constant 0 : index
    %c0_22 = arith.constant 0 : index
    %72 = vector.load %arg9[%c0_21, %c0_22] : memref<8x128xf32, #tpu.memory_space<vmem>>, vector<8x128xf32>
    tpu.vector_store %arg9[%c0_21, %c0_22], %71 {strides = array<i32>} : memref<8x128xf32, #tpu.memory_space<vmem>>, vector<8x128xf32>,
    return
  }
  func.func @transform_0(%arg0: i32) -> (i32, i32) {
    %c0_i32 = arith.constant 0 : i32
    %c0_i32_0 = arith.constant 0 : i32
    return %arg0, %c0_i32 : i32, i32
  }
  func.func @transform_1(%arg0: i32) -> (i32, i32) {
    %c0_i32 = arith.constant 0 : i32
    %c0_i32_0 = arith.constant 0 : i32
    %c0_i32_1 = arith.constant 0 : i32
    return %c0_i32, %c0_i32_0 : i32, i32
  }
  func.func @transform_2(%arg0: i32) -> (i32, i32) {
    %c0_i32 = arith.constant 0 : i32
    %c0_i32_0 = arith.constant 0 : i32
    %c0_i32_1 = arith.constant 0 : i32
    return %c0_i32, %c0_i32_0 : i32, i32
  }
  func.func @transform_3(%arg0: i32) -> (i32, i32) {
    %c0_i32 = arith.constant 0 : i32
    %c0_i32_0 = arith.constant 0 : i32
    %c0_i32_1 = arith.constant 0 : i32
    return %c0_i32, %c0_i32_0 : i32, i32
  }
  func.func @transform_4(%arg0: i32) -> (i32, i32) {
    %c0_i32 = arith.constant 0 : i32
    %c0_i32_0 = arith.constant 0 : i32
    %c0_i32_1 = arith.constant 0 : i32
    return %c0_i32, %c0_i32_0 : i32, i32
  }
  func.func @transform_5(%arg0: i32) -> (i32, i32) {
    %c0_i32 = arith.constant 0 : i32
    %c0_i32_0 = arith.constant 0 : i32
    %c0_i32_1 = arith.constant 0 : i32
    return %c0_i32, %c0_i32_0 : i32, i32
  }
  func.func @transform_6(%arg0: i32) -> (i32, i32) {
    %c0_i32 = arith.constant 0 : i32
    %c0_i32_0 = arith.constant 0 : i32
    %c0_i32_1 = arith.constant 0 : i32
    return %c0_i32, %c0_i32_0 : i32, i32
  }
  func.func @transform_7(%arg0: i32) -> (i32, i32) {
    %c0_i32 = arith.constant 0 : i32
    %c0_i32_0 = arith.constant 0 : i32
    %c0_i32_1 = arith.constant 0 : i32
    return %c0_i32, %c0_i32_0 : i32, i32
  }
  func.func @transform_8(%arg0: i32) -> (i32, i32) {
    %c0_i32 = arith.constant 0 : i32
    %c0_i32_0 = arith.constant 0 : i32
    return %arg0, %c0_i32 : i32, i32
  }
}

</mosaic_0001>

<llo_original>
// kernel: tpu_custom_call.1
$region0: #{tpu_custom_call.1}
  #allocation0 [shape = 'u32[]', space=smem, size = 0x4, offset = 0x4, fixed_abs, tag = 'smem constant byte address 0x4 - core index']
  #allocation1 [shape = 'u32[72,128]{1,0:T(1,128)}', space=vmem, size = 0x9000, scoped, tag = 'internal scratch']
  %s0 = inlined_call_operand.hbm [shape: s32[8,8], index: 0, kind: input, shape index: {}]
  %s1 = inlined_call_operand.hbm [shape: f32[128,128], index: 1, kind: input, shape index: {}]
  %s2 = inlined_call_operand.hbm [shape: f32[128,128], index: 2, kind: input, shape index: {}]
  %s3 = inlined_call_operand.vmem [shape: f32[1,128], index: 3, kind: input, shape index: {}]
  %s4 = inlined_call_operand.hbm [shape: f32[128,128], index: 4, kind: input, shape index: {}]
  %s5 = inlined_call_operand.vmem [shape: f32[1,128], index: 5, kind: input, shape index: {}]
  %s6 = inlined_call_operand.hbm [shape: f32[128,128], index: 6, kind: input, shape index: {}]
  %s7 = inlined_call_operand.vmem [shape: f32[1,128], index: 7, kind: input, shape index: {}]
  %s8 = inlined_call_operand.hbm [shape: f32[8,128], index: 8, kind: output, shape index: {}]
  %s9 = sld [smem:[#allocation0]]
  $region62: #{tpu_custom_call.1} parent=0
    _
  %s11 = ssub.s32 1, %s9
  %s12 = scalar_select 0, %s11, %s9
  $region1: #{tpu_custom_call.1} parent=0
    #allocation2 [shape = 'u8[4096]{0}', space=vmem, size = 0x1000, scoped, tag = 'input window, operand 0, single buffered']
    #allocation3 [shape = 's32[1]{0}', space=sflag, size = 0x4, scoped, tag = 'scoped memory for tpu_custom_call.1']
    #allocation4 [shape = 's32[1]{0}', space=sflag, size = 0x4, scoped, tag = 'scoped memory for tpu_custom_call.1']
    #allocation5 [shape = 'u8[65536]{0}', space=vmem, size = 0x10000, scoped, tag = 'input window, operand 1, single buffered']
    #allocation6 [shape = 's32[1]{0}', space=sflag, size = 0x4, scoped, tag = 'scoped memory for tpu_custom_call.1']
    #allocation7 [shape = 'u8[65536]{0}', space=vmem, size = 0x10000, scoped, tag = 'input window, operand 2, single buffered']
    #allocation8 [shape = 'u8[65536]{0}', space=vmem, size = 0x10000, scoped, tag = 'input window, operand 4, single buffered']
    #allocation9 [shape = 's32[1]{0}', space=sflag, size = 0x4, scoped, tag = 'scoped memory for tpu_custom_call.1']
    #allocation10 [shape = 'u8[65536]{0}', space=vmem, size = 0x10000, scoped, tag = 'input window, operand 6, single buffered']
    #allocation11 [shape = 'u8[4096]{0}', space=vmem, size = 0x1000, scoped, tag = 'output window, operand 0, single buffered']
    %13 = vsyncpa [#allocation3], 0
    %14 = vsyncpa [#allocation6], 0
    %15 = vsyncpa [#allocation9], 0
    %16 = vsyncpa [#allocation4], 0
    // Predicated region
    $region2: #{tpu_custom_call.1} parent=1 // pred_check
      _
    $region3: #{tpu_custom_call.1} parent=1 // pred_check_branch
      %18 = sbr.rel (0) target = $region5
    $region4: #{tpu_custom_call.1} parent=1 // pred_region
      %20 = vsyncadd [#allocation3], 0
      %s22 = sshll.u32 %s0, 4
      %s23 = int_to_ptr.hbm [resolvable:$true] %s22
      %s24 = sshll.u32 [#allocation2], 4
      %s25 = int_to_ptr.vmem [resolvable:$true] %s24
      %27 = dma.hbm_to_vmem [thread:$0]  %s23, 128, %s25, [#allocation3]
    $region5: #{tpu_custom_call.1} parent=1 // pred_fallthru
      _
    // Predicated region
    $region6: #{tpu_custom_call.1} parent=1 // pred_check
      _
    $region7: #{tpu_custom_call.1} parent=1 // pred_check_branch
      %29 = sbr.rel (0) target = $region9
    $region8: #{tpu_custom_call.1} parent=1 // pred_region
      %31 = vsyncadd [#allocation6], 0
      %s32 = sshll.u32 %s1, 4
      %s33 = int_to_ptr.hbm [resolvable:$true] %s32
      %s34 = sshll.u32 [#allocation5], 4
      %s35 = int_to_ptr.vmem [resolvable:$true] %s34
      %40 = dma.hbm_to_vmem [thread:$0]  %s33, 2048, %s35, [#allocation6], 128, 128, 8
    $region9: #{tpu_custom_call.1} parent=1 // pred_fallthru
      _
    // Predicated region
    $region10: #{tpu_custom_call.1} parent=1 // pred_check
      _
    $region11: #{tpu_custom_call.1} parent=1 // pred_check_branch
      %42 = sbr.rel (0) target = $region13
    $region12: #{tpu_custom_call.1} parent=1 // pred_region
      %44 = vsyncadd [#allocation6], 0
      %s45 = sshll.u32 %s2, 4
      %s46 = int_to_ptr.hbm [resolvable:$true] %s45
      %s47 = sshll.u32 [#allocation7], 4
      %s48 = int_to_ptr.vmem [resolvable:$true] %s47
      %53 = dma.hbm_to_vmem [thread:$0]  %s46, 2048, %s48, [#allocation6], 128, 128, 8
    $region13: #{tpu_custom_call.1} parent=1 // pred_fallthru
      _
    // Predicated region
    $region14: #{tpu_custom_call.1} parent=1 // pred_check
      _
    $region15: #{tpu_custom_call.1} parent=1 // pred_check_branch
      %55 = sbr.rel (0) target = $region17
    $region16: #{tpu_custom_call.1} parent=1 // pred_region
      _
    $region17: #{tpu_custom_call.1} parent=1 // pred_fallthru
      _
    // Predicated region
    $region18: #{tpu_custom_call.1} parent=1 // pred_check
      _
    $region19: #{tpu_custom_call.1} parent=1 // pred_check_branch
      %57 = sbr.rel (0) target = $region21
    $region20: #{tpu_custom_call.1} parent=1 // pred_region
      %59 = vsyncadd [#allocation9], 0
      %s60 = sshll.u32 %s4, 4
      %s61 = int_to_ptr.hbm [resolvable:$true] %s60
      %s62 = sshll.u32 [#allocation8], 4
      %s63 = int_to_ptr.vmem [resolvable:$true] %s62
      %68 = dma.hbm_to_vmem [thread:$0]  %s61, 2048, %s63, [#allocation9], 128, 128, 8
    $region21: #{tpu_custom_call.1} parent=1 // pred_fallthru
      _
    // Predicated region
    $region22: #{tpu_custom_call.1} parent=1 // pred_check
      _
    $region23: #{tpu_custom_call.1} parent=1 // pred_check_branch
      %70 = sbr.rel (0) target = $region25
    $region24: #{tpu_custom_call.1} parent=1 // pred_region
      _
    $region25: #{tpu_custom_call.1} parent=1 // pred_fallthru
      _
    // Predicated region
    $region26: #{tpu_custom_call.1} parent=1 // pred_check
      _
    $region27: #{tpu_custom_call.1} parent=1 // pred_check_branch
      %72 = sbr.rel (0) target = $region29
    $region28: #{tpu_custom_call.1} parent=1 // pred_region
      %74 = vsyncadd [#allocation9], 0
      %s75 = sshll.u32 %s6, 4
      %s76 = int_to_ptr.hbm [resolvable:$true] %s75
      %s77 = sshll.u32 [#allocation10], 4
      %s78 = int_to_ptr.vmem [resolvable:$true] %s77
      %83 = dma.hbm_to_vmem [thread:$0]  %s76, 2048, %s78, [#allocation9], 128, 128, 8
    $region29: #{tpu_custom_call.1} parent=1 // pred_fallthru
      _
    // Predicated region
    $region30: #{tpu_custom_call.1} parent=1 // pred_check
      _
    $region31: #{tpu_custom_call.1} parent=1 // pred_check_branch
      %85 = sbr.rel (0) target = $region33
    $region32: #{tpu_custom_call.1} parent=1 // pred_region
      _
    $region33: #{tpu_custom_call.1} parent=1 // pred_fallthru
      _
    // Predicated region
    $region34: #{tpu_custom_call.1} parent=1 // pred_check
      _
    $region35: #{tpu_custom_call.1} parent=1 // pred_check_branch
      %87 = sbr.rel (0) target = $region37
    $region36: #{tpu_custom_call.1} parent=1 // pred_region
      %89 = dma.done [#allocation3], 128
    $region37: #{tpu_custom_call.1} parent=1 // pred_fallthru
      _
    // Predicated region
    $region38: #{tpu_custom_call.1} parent=1 // pred_check
      _
    $region39: #{tpu_custom_call.1} parent=1 // pred_check_branch
      %91 = sbr.rel (0) target = $region41
    $region40: #{tpu_custom_call.1} parent=1 // pred_region
      %93 = dma.done [#allocation6], 2048
    $region41: #{tpu_custom_call.1} parent=1 // pred_fallthru
      _
    // Predicated region
    $region42: #{tpu_custom_call.1} parent=1 // pred_check
      _
    $region43: #{tpu_custom_call.1} parent=1 // pred_check_branch
      %95 = sbr.rel (0) target = $region45
    $region44: #{tpu_custom_call.1} parent=1 // pred_region
      %97 = dma.done [#allocation6], 2048
    $region45: #{tpu_custom_call.1} parent=1 // pred_fallthru
      _
    // Predicated region
    $region46: #{tpu_custom_call.1} parent=1 // pred_check
      _
    $region47: #{tpu_custom_call.1} parent=1 // pred_check_branch
      %99 = sbr.rel (0) target = $region49
    $region48: #{tpu_custom_call.1} parent=1 // pred_region
      %101 = dma.done [#allocation9], 2048
    $region49: #{tpu_custom_call.1} parent=1 // pred_fallthru
      _
    // Predicated region
    $region50: #{tpu_custom_call.1} parent=1 // pred_check
      _
    $region51: #{tpu_custom_call.1} parent=1 // pred_check_branch
      %103 = sbr.rel (0) target = $region53
    $region52: #{tpu_custom_call.1} parent=1 // pred_region
      %105 = dma.done [#allocation9], 2048
    $region53: #{tpu_custom_call.1} parent=1 // pred_fallthru
      _
    %v106 = vld [vmem:[#allocation2] sm:$0xff]
    %v107 = vlaneseq
    %v108 = vand.u32 %v107, 127
    %109 = vset.pattern.permute.xlu0 0
    %110 = vperm.xlu0 %109, %v106
    %v111 = vpop.permute.xlu0 %110
    %vm112 = vcmp.eq.s32.totalorder %v111, %v108
    %v113 = vsel %vm112, 1, 0
    %v114 = vcvt.s32.f32 %v113
    %v115 = vadd.f32 %v114, 0.0
    %116 = vset.pattern.permute.xlu0 1
    %117 = vperm.xlu0 %116, %v106
    %v118 = vpop.permute.xlu0 %117
    %vm119 = vcmp.eq.s32.totalorder %v118, %v108
    %v120 = vsel %vm119, 1, 0
    %v121 = vcvt.s32.f32 %v120
    %v122 = vadd.f32 %v115, %v121
    %123 = vset.pattern.permute.xlu0 2
    %124 = vperm.xlu0 %123, %v106
    %v125 = vpop.permute.xlu0 %124
    %vm126 = vcmp.eq.s32.totalorder %v125, %v108
    %v127 = vsel %vm126, 1, 0
    %v128 = vcvt.s32.f32 %v127
    %v129 = vadd.f32 %v122, %v128
    %130 = vset.pattern.permute.xlu0 3
    %131 = vperm.xlu0 %130, %v106
    %v132 = vpop.permute.xlu0 %131
    %vm133 = vcmp.eq.s32.totalorder %v132, %v108
    %v134 = vsel %vm133, 1, 0
    %v135 = vcvt.s32.f32 %v134
    %v136 = vadd.f32 %v129, %v135
    %137 = vset.pattern.permute.xlu0 4
    %138 = vperm.xlu0 %137, %v106
    %v139 = vpop.permute.xlu0 %138
    %vm140 = vcmp.eq.s32.totalorder %v139, %v108
    %v141 = vsel %vm140, 1, 0
    %v142 = vcvt.s32.f32 %v141
    %v143 = vadd.f32 %v136, %v142
    %144 = vset.pattern.permute.xlu0 5
    %145 = vperm.xlu0 %144, %v106
    %v146 = vpop.permute.xlu0 %145
    %vm147 = vcmp.eq.s32.totalorder %v146, %v108
    %v148 = vsel %vm147, 1, 0
    %v149 = vcvt.s32.f32 %v148
    %v150 = vadd.f32 %v143, %v149
    %151 = vset.pattern.permute.xlu0 6
    %152 = vperm.xlu0 %151, %v106
    %v153 = vpop.permute.xlu0 %152
    %vm154 = vcmp.eq.s32.totalorder %v153, %v108
    %v155 = vsel %vm154, 1, 0
    %v156 = vcvt.s32.f32 %v155
    %v157 = vadd.f32 %v150, %v156
    %158 = vset.pattern.permute.xlu0 7
    %159 = vperm.xlu0 %158, %v106
    %v160 = vpop.permute.xlu0 %159
    %vm161 = vcmp.eq.s32.totalorder %v160, %v108
    %v162 = vsel %vm161, 1, 0
    %v163 = vcvt.s32.f32 %v162
    %v164 = vadd.f32 %v157, %v163
    %v165 = vld [vmem:[#allocation5] sm:$0xff]
    %v166 = vld [vmem:[#allocation5 + $0x8] sm:$0xff]
    %v167 = vld [vmem:[#allocation5 + $0x10] sm:$0xff]
    %v168 = vld [vmem:[#allocation5 + $0x18] sm:$0xff]
    %v169 = vld [vmem:[#allocation5 + $0x20] sm:$0xff]
    %v170 = vld [vmem:[#allocation5 + $0x28] sm:$0xff]
    %v171 = vld [vmem:[#allocation5 + $0x30] sm:$0xff]
    %v172 = vld [vmem:[#allocation5 + $0x38] sm:$0xff]
    %v173 = vld [vmem:[#allocation5 + $0x40] sm:$0xff]
    %v174 = vld [vmem:[#allocation5 + $0x48] sm:$0xff]
    %v175 = vld [vmem:[#allocation5 + $0x50] sm:$0xff]
    %v176 = vld [vmem:[#allocation5 + $0x58] sm:$0xff]
    %v177 = vld [vmem:[#allocation5 + $0x60] sm:$0xff]
    %v178 = vld [vmem:[#allocation5 + $0x68] sm:$0xff]
    %v179 = vld [vmem:[#allocation5 + $0x70] sm:$0xff]
    %v180 = vld [vmem:[#allocation5 + $0x78] sm:$0xff]
    %181 = vmatpush.msra.mxu0 %v180
    %182 = vmatpush.msra.mxu0 %v179
    %183 = vmatpush.msra.mxu0 %v178
    %184 = vmatpush.msra.mxu0 %v177
    %185 = vmatpush.msra.mxu0 %v176
    %186 = vmatpush.msra.mxu0 %v175
    %187 = vmatpush.msra.mxu0 %v174
    %188 = vmatpush.msra.mxu0 %v173
    %189 = vmatpush.msra.mxu0 %v172
    %190 = vmatpush.msra.mxu0 %v171
    %191 = vmatpush.msra.mxu0 %v170
    %192 = vmatpush.msra.mxu0 %v169
    %193 = vmatpush.msra.mxu0 %v168
    %194 = vmatpush.msra.mxu0 %v167
    %195 = vmatpush.msra.mxu0 %v166
    %196 = vmatpush.msra.mxu0 %v165
    %197 = vmatmul.f32.gmra.mxu0 %v164
    %v198 = vpop.f32.mrf.mxu0
    %v199 = vadd.f32 0.0, %v198
    %200 = vdwg.mxu0
    %v201 = vld [vmem:[#allocation7] sm:$0xff]
    %v202 = vld [vmem:[#allocation7 + $0x8] sm:$0xff]
    %v203 = vld [vmem:[#allocation7 + $0x10] sm:$0xff]
    %v204 = vld [vmem:[#allocation7 + $0x18] sm:$0xff]
    %v205 = vld [vmem:[#allocation7 + $0x20] sm:$0xff]
    %v206 = vld [vmem:[#allocation7 + $0x28] sm:$0xff]
    %v207 = vld [vmem:[#allocation7 + $0x30] sm:$0xff]
    %v208 = vld [vmem:[#allocation7 + $0x38] sm:$0xff]
    %v209 = vld [vmem:[#allocation7 + $0x40] sm:$0xff]
    %v210 = vld [vmem:[#allocation7 + $0x48] sm:$0xff]
    %v211 = vld [vmem:[#allocation7 + $0x50] sm:$0xff]
    %v212 = vld [vmem:[#allocation7 + $0x58] sm:$0xff]
    %v213 = vld [vmem:[#allocation7 + $0x60] sm:$0xff]
    %v214 = vld [vmem:[#allocation7 + $0x68] sm:$0xff]
    %v215 = vld [vmem:[#allocation7 + $0x70] sm:$0xff]
    %v216 = vld [vmem:[#allocation7 + $0x78] sm:$0xff]
    %v217 = vld [vmem:[%s3] sm:$0x1]
    %v219 = vperm.slane %v217, 0
    %221 = vmatpush.msra.mxu0 %v216
    %222 = vmatpush.msra.mxu0 %v215
    %223 = vmatpush.msra.mxu0 %v214
    %224 = vmatpush.msra.mxu0 %v213
    %225 = vmatpush.msra.mxu0 %v212
    %226 = vmatpush.msra.mxu0 %v211
    %227 = vmatpush.msra.mxu0 %v210
    %228 = vmatpush.msra.mxu0 %v209
    %229 = vmatpush.msra.mxu0 %v208
    %230 = vmatpush.msra.mxu0 %v207
    %231 = vmatpush.msra.mxu0 %v206
    %232 = vmatpush.msra.mxu0 %v205
    %233 = vmatpush.msra.mxu0 %v204
    %234 = vmatpush.msra.mxu0 %v203
    %235 = vmatpush.msra.mxu0 %v202
    %236 = vmatpush.msra.mxu0 %v201
    %237 = vmatmul.f32.gmra.mxu0 %v199
    %v238 = vpop.f32.mrf.mxu0
    %v239 = vadd.f32 %v219, %v238
    %240 = vdwg.mxu0
    %v241 = vmax.f32 %v239, 0.0
    %v242 = vld [vmem:[#allocation8] sm:$0xff]
    %v243 = vld [vmem:[#allocation8 + $0x8] sm:$0xff]
    %v244 = vld [vmem:[#allocation8 + $0x10] sm:$0xff]
    %v245 = vld [vmem:[#allocation8 + $0x18] sm:$0xff]
    %v246 = vld [vmem:[#allocation8 + $0x20] sm:$0xff]
    %v247 = vld [vmem:[#allocation8 + $0x28] sm:$0xff]
    %v248 = vld [vmem:[#allocation8 + $0x30] sm:$0xff]
    %v249 = vld [vmem:[#allocation8 + $0x38] sm:$0xff]
    %v250 = vld [vmem:[#allocation8 + $0x40] sm:$0xff]
    %v251 = vld [vmem:[#allocation8 + $0x48] sm:$0xff]
    %v252 = vld [vmem:[#allocation8 + $0x50] sm:$0xff]
    %v253 = vld [vmem:[#allocation8 + $0x58] sm:$0xff]
    %v254 = vld [vmem:[#allocation8 + $0x60] sm:$0xff]
    %v255 = vld [vmem:[#allocation8 + $0x68] sm:$0xff]
    %v256 = vld [vmem:[#allocation8 + $0x70] sm:$0xff]
    %v257 = vld [vmem:[#allocation8 + $0x78] sm:$0xff]
    %v258 = vld [vmem:[%s5] sm:$0x1]
    %v260 = vperm.slane %v258, 0
    %262 = vmatpush.msra.mxu0 %v257
    %263 = vmatpush.msra.mxu0 %v256
    %264 = vmatpush.msra.mxu0 %v255
    %265 = vmatpush.msra.mxu0 %v254
    %266 = vmatpush.msra.mxu0 %v253
    %267 = vmatpush.msra.mxu0 %v252
    %268 = vmatpush.msra.mxu0 %v251
    %269 = vmatpush.msra.mxu0 %v250
    %270 = vmatpush.msra.mxu0 %v249
    %271 = vmatpush.msra.mxu0 %v248
    %272 = vmatpush.msra.mxu0 %v247
    %273 = vmatpush.msra.mxu0 %v246
    %274 = vmatpush.msra.mxu0 %v245
    %275 = vmatpush.msra.mxu0 %v244
    %276 = vmatpush.msra.mxu0 %v243
    %277 = vmatpush.msra.mxu0 %v242
    %278 = vmatmul.f32.gmra.mxu0 %v241
    %v279 = vpop.f32.mrf.mxu0
    %v280 = vadd.f32 %v260, %v279
    %281 = vdwg.mxu0
    %v282 = vmax.f32 %v280, 0.0
    %v283 = vld [vmem:[#allocation10] sm:$0xff]
    %v284 = vld [vmem:[#allocation10 + $0x8] sm:$0xff]
    %v285 = vld [vmem:[#allocation10 + $0x10] sm:$0xff]
    %v286 = vld [vmem:[#allocation10 + $0x18] sm:$0xff]
    %v287 = vld [vmem:[#allocation10 + $0x20] sm:$0xff]
    %v288 = vld [vmem:[#allocation10 + $0x28] sm:$0xff]
    %v289 = vld [vmem:[#allocation10 + $0x30] sm:$0xff]
    %v290 = vld [vmem:[#allocation10 + $0x38] sm:$0xff]
    %v291 = vld [vmem:[#allocation10 + $0x40] sm:$0xff]
    %v292 = vld [vmem:[#allocation10 + $0x48] sm:$0xff]
    %v293 = vld [vmem:[#allocation10 + $0x50] sm:$0xff]
    %v294 = vld [vmem:[#allocation10 + $0x58] sm:$0xff]
    %v295 = vld [vmem:[#allocation10 + $0x60] sm:$0xff]
    %v296 = vld [vmem:[#allocation10 + $0x68] sm:$0xff]
    %v297 = vld [vmem:[#allocation10 + $0x70] sm:$0xff]
    %v298 = vld [vmem:[#allocation10 + $0x78] sm:$0xff]
    %v299 = vld [vmem:[%s7] sm:$0x1]
    %v301 = vperm.slane %v299, 0
    %303 = vmatpush.msra.mxu0 %v298
    %304 = vmatpush.msra.mxu0 %v297
    %305 = vmatpush.msra.mxu0 %v296
    %306 = vmatpush.msra.mxu0 %v295
    %307 = vmatpush.msra.mxu0 %v294
    %308 = vmatpush.msra.mxu0 %v293
    %309 = vmatpush.msra.mxu0 %v292
    %310 = vmatpush.msra.mxu0 %v291
    %311 = vmatpush.msra.mxu0 %v290
    %312 = vmatpush.msra.mxu0 %v289
    %313 = vmatpush.msra.mxu0 %v288
    %314 = vmatpush.msra.mxu0 %v287
    %315 = vmatpush.msra.mxu0 %v286
    %316 = vmatpush.msra.mxu0 %v285
    %317 = vmatpush.msra.mxu0 %v284
    %318 = vmatpush.msra.mxu0 %v283
    %319 = vmatmul.f32.gmra.mxu0 %v282
    %v320 = vpop.f32.mrf.mxu0
    %v321 = vadd.f32 %v301, %v320
    %322 = vdwg.mxu0
    %323 = vst [vmem:[#allocation11] sm:$0xff] %v321
    // Predicated region
    $region54: #{tpu_custom_call.1} parent=1 // pred_check
      _
    $region55: #{tpu_custom_call.1} parent=1 // pred_check_branch
      %325 = sbr.rel (0) target = $region57
    $region56: #{tpu_custom_call.1} parent=1 // pred_region
      %327 = vsyncadd [#allocation4], 0
      %s329 = sshll.u32 [#allocation11], 4
      %s330 = int_to_ptr.vmem [resolvable:$true] %s329
      %s331 = sshll.u32 %s8, 4
      %s332 = int_to_ptr.hbm [resolvable:$true] %s331
      %334 = dma.vmem_to_hbm [thread:$0]  %s330, 128, %s332, [#allocation4]
    $region57: #{tpu_custom_call.1} parent=1 // pred_fallthru
      _
    // Predicated region
    $region58: #{tpu_custom_call.1} parent=1 // pred_check
      _
    $region59: #{tpu_custom_call.1} parent=1 // pred_check_branch
      %336 = sbr.rel (0) target = $region61
    $region60: #{tpu_custom_call.1} parent=1 // pred_region
      %338 = dma.done [#allocation4], 128
    $region61: #{tpu_custom_call.1} parent=1 // pred_fallthru
      _
    %339 = vsyncpa [#allocation3], 1
    %340 = vsyncpa [#allocation6], 1
    %341 = vsyncpa [#allocation9], 1
    %342 = vsyncpa [#allocation4], 1

</llo_original>
